<compile_context>
chip_gen: v7x
topology: tpu7x:2x2x1
jax: 0.10.0
libtpu: 0.0.40
codegen_flags: <defaults>
</compile_context>

<pallas_src>
import jax
import jax.numpy as jnp
from jax.experimental import pallas as pl
from jax.experimental.pallas import tpu as pltpu


def _coattn_kernel(ifeat_ref, qfeat_ref, ifeats_ref, qfeats_ref,
                   iout_ref, qout_ref):
    # Block views:
    #   ifeat_ref / qfeat_ref : (TN, D)
    #   ifeats_ref            : (TN, F, D)
    #   qfeats_ref            : (TN, L, D)
    #   iout_ref  / qout_ref  : (TN, D)
    ifeat = ifeat_ref[...].astype(jnp.float32)      # tiny (TN, D) casts only
    qfeat = qfeat_ref[...].astype(jnp.float32)
    ifeats = ifeats_ref[...]                        # keep native dtype (no
    qfeats = qfeats_ref[...]                        # full-block f32 copies)

    # Scores: batched M=1 matvecs -> VPU broadcast-multiply + XLU lane
    # reduce (no MXU, no .T); f32 accumulation via promotion.
    iscores = jnp.sum(qfeat[:, None, :] * ifeats, axis=-1)   # (TN, F) f32
    qscores = jnp.sum(ifeat[:, None, :] * qfeats, axis=-1)   # (TN, L) f32

    def _softmax_last(x):
        # Exact normalization (no approx reciprocal) for parity with the
        # reference; the divide is negligible for a memory-bound kernel.
        m = jnp.max(x, axis=-1, keepdims=True)
        e = jnp.exp(x - m)
        return e / jnp.sum(e, axis=-1, keepdims=True)

    iattn = _softmax_last(iscores)                            # (TN, F)
    qattn = _softmax_last(qscores)                            # (TN, L)

    # Updates: broadcast-multiply + XLU sublane reduce.
    i_upd = jnp.sum(qattn[:, :, None] * qfeats, axis=1)       # (TN, D) f32
    q_upd = jnp.sum(iattn[:, :, None] * ifeats, axis=1)       # (TN, D) f32

    # Two direct dense stores (no concat temporary, no column split later).
    iout_ref[...] = (ifeat + i_upd).astype(iout_ref.dtype)
    qout_ref[...] = (qfeat + q_upd).astype(qout_ref.dtype)


def _choose_block_n(N, cap):
    """Pick the batch tile TN.

    Constraints: TN divides N (blocks tile the (N,F,D)/(N,L,D) inputs
    exactly -> no jnp.pad HBM copies) and TN % 8 == 0 or TN == N (so the
    2-D (TN, D) tiles satisfy the (8,128) sublane rule).  Prefers
    TN <= N//2 so the 'parallel' grid has >= 2 steps for v7x's two
    TensorCores.
    """
    def best_not_above(limit):
        limit = min(limit, N)
        for t in range(limit, 0, -1):
            if N % t == 0 and (t % 8 == 0 or t == N):
                return t
        return None

    tn = best_not_above(min(cap, max(1, N // 2)))   # prefer >= 2 grid steps
    if tn is None:
        tn = best_not_above(cap)
    if tn is None:
        tn = N                                      # last resort: one step
    return tn


def co_attention(ifeat, qfeat, ifeats, qfeats, *, block_n=None):
    """Pallas implementation of CoAttention.forward.

    Args:
      ifeat : (N, 1, D)
      qfeat : (N, 1, D)
      ifeats: (N, F, D)
      qfeats: (N, L, D)
    Returns:
      (ifeat_out, qfeat_out), each (N, 1, D).
    """
    N, q1, D = ifeat.shape
    assert q1 == 1, "CoAttention expects a size-1 query dim"
    F = ifeats.shape[1]
    L = qfeats.shape[1]
    dtype = ifeat.dtype
    itemsize = jnp.dtype(dtype).itemsize

    # Free (no-copy) reshapes: squeeze the size-1 query dim so the small
    # per-example vectors travel as sublane-dense (TN, D) tiles.
    ifeat2 = ifeat.reshape(N, D)
    qfeat2 = qfeat.reshape(N, D)

    # ---- Block-size heuristic ------------------------------------------
    # Per-example bytes: input DMA, output DMA, and the in-kernel f32
    # working set (scores/attn, cast vectors, one broadcast product).
    in_bytes = (F + L + 2) * D * itemsize
    out_bytes = 2 * D * itemsize
    work_f32 = (2 * (F + L) * D + 4 * D + 3 * (F + L)) * 4
    per_ex = 2 * in_bytes + 2 * out_bytes + work_f32      # 2x: double buffers
    vmem_budget = 40 << 20        # headroom inside v7x's 64 MiB physical VMEM
    dma_target = (4 << 20) // max(1, in_bytes)   # ~4 MiB of input per step
    cap = max(1, min(dma_target, vmem_budget // max(1, per_ex)))

    if block_n is None:
        block_n = _choose_block_n(N, cap)
    TN = block_n
    assert N % TN == 0 and (TN % 8 == 0 or TN == N), (N, TN)

    grid = (N // TN,)

    # Raise the scoped VMEM limit for the chosen block (default is only
    # 16 MiB on v5e / 32 MiB on v6e & v7x); stay below v7x's 64 MiB.
    vmem_need = TN * per_ex
    vmem_limit = int(min(48 << 20, max(32 << 20, (vmem_need * 3) // 2 + (2 << 20))))

    cost = pl.CostEstimate(
        flops=4 * N * (F + L) * D,            # 2 score matvecs + 2 weighted sums
        transcendentals=N * (F + L),          # exp
        bytes_accessed=N * ((F + L + 2) * D + 2 * D) * itemsize)

    iout, qout = pl.pallas_call(
        _coattn_kernel,
        out_shape=(jax.ShapeDtypeStruct((N, D), dtype),
                   jax.ShapeDtypeStruct((N, D), dtype)),
        grid_spec=pltpu.PrefetchScalarGridSpec(
            num_scalar_prefetch=0,
            grid=grid,
            in_specs=[
                pl.BlockSpec((TN, D), lambda n: (n, 0)),
                pl.BlockSpec((TN, D), lambda n: (n, 0)),
                pl.BlockSpec((TN, F, D), lambda n: (n, 0, 0)),
                pl.BlockSpec((TN, L, D), lambda n: (n, 0, 0)),
            ],
            out_specs=[
                pl.BlockSpec((TN, D), lambda n: (n, 0)),
                pl.BlockSpec((TN, D), lambda n: (n, 0)),
            ],
        ),
        compiler_params=pltpu.CompilerParams(
            dimension_semantics=("parallel",),
            vmem_limit_bytes=vmem_limit),
        cost_estimate=cost,
    )(ifeat2, qfeat2, ifeats, qfeats)

    return iout.reshape(N, 1, D), qout.reshape(N, 1, D)


def _reference(ifeat, qfeat, ifeats, qfeats):
    # Pure-JAX reference mirroring the PyTorch forward.  HIGHEST precision
    # so the einsums are not computed with default bf16 MXU passes on TPU
    # (the Pallas kernel computes in full f32 on the VPU).
    hp = jax.lax.Precision.HIGHEST
    iscores = jnp.einsum("nqd,nfd->nqf", qfeat, ifeats, precision=hp)   # (N,1,F)
    qscores = jnp.einsum("nqd,nld->nql", ifeat, qfeats, precision=hp)   # (N,1,L)
    ifeat_out = ifeat + jnp.einsum("nql,nld->nqd",
                                   jax.nn.softmax(qscores, axis=-1), qfeats,
                                   precision=hp)
    qfeat_out = qfeat + jnp.einsum("nqf,nfd->nqd",
                                   jax.nn.softmax(iscores, axis=-1), ifeats,
                                   precision=hp)
    return ifeat_out, qfeat_out


if __name__ == "__main__":
    key = jax.random.PRNGKey(0)

    # Spec-sized tiny config (N=2) plus one that exercises a multi-step
    # 'parallel' grid (N=16 -> TN=8, 2 steps).
    for (N, D, F, L) in [(2, 32, 16, 8), (16, 32, 16, 8)]:
        k1, k2, k3, k4 = jax.random.split(jax.random.fold_in(key, N), 4)
        ifeat = jax.random.normal(k1, (N, 1, D), dtype=jnp.float32)
        qfeat = jax.random.normal(k2, (N, 1, D), dtype=jnp.float32)
        ifeats = jax.random.normal(k3, (N, F, D), dtype=jnp.float32)
        qfeats = jax.random.normal(k4, (N, L, D), dtype=jnp.float32)

        i_out, q_out = co_attention(ifeat, qfeat, ifeats, qfeats)
        jax.block_until_ready((i_out, q_out))

        i_ref, q_ref = _reference(ifeat, qfeat, ifeats, qfeats)
        assert i_out.shape == (N, 1, D) and q_out.shape == (N, 1, D)
        # Both sides are plain f32 (exact softmax divide in the kernel,
        # HIGHEST-precision reference); expected difference is ~1e-6.
        assert jnp.allclose(i_out, i_ref, atol=1e-3, rtol=1e-3), "ifeat mismatch"
        assert jnp.allclose(q_out, q_ref, atol=1e-3, rtol=1e-3), "qfeat mismatch"

    print("KERNEL_OK")
</pallas_src>

<mosaic_0001>
module attributes {stable_mosaic.version = 11 : i64} {
  func.func @_coattn_kernel(%arg0: i32, %arg1: memref<2x32xf32, #tpu.memory_space<vmem>>, %arg2: memref<2x32xf32, #tpu.memory_space<vmem>>, %arg3: memref<2x16x32xf32, #tpu.memory_space<vmem>>, %arg4: memref<2x8x32xf32, #tpu.memory_space<vmem>>, %arg5: memref<2x32xf32, #tpu.memory_space<vmem>>, %arg6: memref<2x32xf32, #tpu.memory_space<vmem>>) attributes {dimension_semantics = [#tpu.dimension_semantics<parallel>], iteration_bounds = array<i64: 1>, scalar_prefetch = 0 : i64, scratch_operands = 0 : i64, tpu.core_type = #tpu.core_type<tc>, window_params = [{transform_indices = @transform_0, window_bounds = array<i64: 2, 32>}, {transform_indices = @transform_1, window_bounds = array<i64: 2, 32>}, {transform_indices = @transform_2, window_bounds = array<i64: 2, 16, 32>}, {transform_indices = @transform_3, window_bounds = array<i64: 2, 8, 32>}, {transform_indices = @transform_4, window_bounds = array<i64: 2, 32>}, {transform_indices = @transform_5, window_bounds = array<i64: 2, 32>}]} {
    %c0 = arith.constant 0 : index
    %c0_0 = arith.constant 0 : index
    %0 = vector.load %arg1[%c0, %c0_0] : memref<2x32xf32, #tpu.memory_space<vmem>>, vector<2x32xf32>
    %c0_1 = arith.constant 0 : index
    %c0_2 = arith.constant 0 : index
    %1 = vector.load %arg2[%c0_1, %c0_2] : memref<2x32xf32, #tpu.memory_space<vmem>>, vector<2x32xf32>
    %c0_3 = arith.constant 0 : index
    %c0_4 = arith.constant 0 : index
    %c0_5 = arith.constant 0 : index
    %2 = vector.load %arg3[%c0_3, %c0_4, %c0_5] : memref<2x16x32xf32, #tpu.memory_space<vmem>>, vector<2x16x32xf32>
    %c0_6 = arith.constant 0 : index
    %c0_7 = arith.constant 0 : index
    %c0_8 = arith.constant 0 : index
    %3 = vector.load %arg4[%c0_6, %c0_7, %c0_8] : memref<2x8x32xf32, #tpu.memory_space<vmem>>, vector<2x8x32xf32>
    %4 = vector.shape_cast %1 : vector<2x32xf32> to vector<2x1x32xf32>
    %5 = vector.broadcast %4 : vector<2x1x32xf32> to vector<2x16x32xf32>
    %6 = arith.mulf %5, %2 : vector<2x16x32xf32>
    %cst = arith.constant dense<0.000000e+00> : vector<2x16xf32>
    %7 = vector.multi_reduction <add>, %6, %cst [2] : vector<2x16x32xf32> to vector<2x16xf32>
    %8 = vector.shape_cast %0 : vector<2x32xf32> to vector<2x1x32xf32>
    %9 = vector.broadcast %8 : vector<2x1x32xf32> to vector<2x8x32xf32>
    %10 = arith.mulf %9, %3 : vector<2x8x32xf32>
    %cst_9 = arith.constant dense<0.000000e+00> : vector<2x8xf32>
    %11 = vector.multi_reduction <add>, %10, %cst_9 [2] : vector<2x8x32xf32> to vector<2x8xf32>
    %cst_10 = arith.constant dense<0xFF800000> : vector<2xf32>
    %12 = vector.multi_reduction <maximumf>, %7, %cst_10 [1] : vector<2x16xf32> to vector<2xf32>
    %13 = vector.shape_cast %12 : vector<2xf32> to vector<2x1xf32>
    %14 = vector.broadcast %13 : vector<2x1xf32> to vector<2x16xf32>
    %15 = arith.subf %7, %14 : vector<2x16xf32>
    %16 = math.exp %15 : vector<2x16xf32>
    %cst_11 = arith.constant dense<0.000000e+00> : vector<2xf32>
    %17 = vector.multi_reduction <add>, %16, %cst_11 [1] : vector<2x16xf32> to vector<2xf32>
    %18 = vector.shape_cast %17 : vector<2xf32> to vector<2x1xf32>
    %19 = vector.broadcast %18 : vector<2x1xf32> to vector<2x16xf32>
    %20 = arith.divf %16, %19 : vector<2x16xf32>
    %cst_12 = arith.constant dense<0xFF800000> : vector<2xf32>
    %21 = vector.multi_reduction <maximumf>, %11, %cst_12 [1] : vector<2x8xf32> to vector<2xf32>
    %22 = vector.shape_cast %21 : vector<2xf32> to vector<2x1xf32>
    %23 = vector.broadcast %22 : vector<2x1xf32> to vector<2x8xf32>
    %24 = arith.subf %11, %23 : vector<2x8xf32>
    %25 = math.exp %24 : vector<2x8xf32>
    %cst_13 = arith.constant dense<0.000000e+00> : vector<2xf32>
    %26 = vector.multi_reduction <add>, %25, %cst_13 [1] : vector<2x8xf32> to vector<2xf32>
    %27 = vector.shape_cast %26 : vector<2xf32> to vector<2x1xf32>
    %28 = vector.broadcast %27 : vector<2x1xf32> to vector<2x8xf32>
    %29 = arith.divf %25, %28 : vector<2x8xf32>
    %30 = vector.shape_cast %29 : vector<2x8xf32> to vector<2x8x1xf32>
    %31 = vector.broadcast %30 : vector<2x8x1xf32> to vector<2x8x32xf32>
    %32 = arith.mulf %31, %3 : vector<2x8x32xf32>
    %cst_14 = arith.constant dense<0.000000e+00> : vector<2x32xf32>
    %33 = vector.multi_reduction <add>, %32, %cst_14 [1] : vector<2x8x32xf32> to vector<2x32xf32>
    %34 = vector.shape_cast %20 : vector<2x16xf32> to vector<2x16x1xf32>
    %35 = vector.broadcast %34 : vector<2x16x1xf32> to vector<2x16x32xf32>
    %36 = arith.mulf %35, %2 : vector<2x16x32xf32>
    %cst_15 = arith.constant dense<0.000000e+00> : vector<2x32xf32>
    %37 = vector.multi_reduction <add>, %36, %cst_15 [1] : vector<2x16x32xf32> to vector<2x32xf32>
    %38 = arith.addf %0, %33 : vector<2x32xf32>
    %c0_16 = arith.constant 0 : index
    %c0_17 = arith.constant 0 : index
    %39 = vector.load %arg5[%c0_16, %c0_17] : memref<2x32xf32, #tpu.memory_space<vmem>>, vector<2x32xf32>
    tpu.vector_store %arg5[%c0_16, %c0_17], %38 {strides = array<i32>} : memref<2x32xf32, #tpu.memory_space<vmem>>, vector<2x32xf32>,
    %40 = arith.addf %1, %37 : vector<2x32xf32>
    %c0_18 = arith.constant 0 : index
    %c0_19 = arith.constant 0 : index
    %41 = vector.load %arg6[%c0_18, %c0_19] : memref<2x32xf32, #tpu.memory_space<vmem>>, vector<2x32xf32>
    tpu.vector_store %arg6[%c0_18, %c0_19], %40 {strides = array<i32>} : memref<2x32xf32, #tpu.memory_space<vmem>>, vector<2x32xf32>,
    return
  }
  func.func @transform_0(%arg0: i32) -> (i32, i32) {
    %c0_i32 = arith.constant 0 : i32
    %c0_i32_0 = arith.constant 0 : i32
    return %arg0, %c0_i32 : i32, i32
  }
  func.func @transform_1(%arg0: i32) -> (i32, i32) {
    %c0_i32 = arith.constant 0 : i32
    %c0_i32_0 = arith.constant 0 : i32
    return %arg0, %c0_i32 : i32, i32
  }
  func.func @transform_2(%arg0: i32) -> (i32, i32, i32) {
    %c0_i32 = arith.constant 0 : i32
    %c0_i32_0 = arith.constant 0 : i32
    %c0_i32_1 = arith.constant 0 : i32
    return %arg0, %c0_i32, %c0_i32_0 : i32, i32, i32
  }
  func.func @transform_3(%arg0: i32) -> (i32, i32, i32) {
    %c0_i32 = arith.constant 0 : i32
    %c0_i32_0 = arith.constant 0 : i32
    %c0_i32_1 = arith.constant 0 : i32
    return %arg0, %c0_i32, %c0_i32_0 : i32, i32, i32
  }
  func.func @transform_4(%arg0: i32) -> (i32, i32) {
    %c0_i32 = arith.constant 0 : i32
    %c0_i32_0 = arith.constant 0 : i32
    return %arg0, %c0_i32 : i32, i32
  }
  func.func @transform_5(%arg0: i32) -> (i32, i32) {
    %c0_i32 = arith.constant 0 : i32
    %c0_i32_0 = arith.constant 0 : i32
    return %arg0, %c0_i32 : i32, i32
  }
}

</mosaic_0001>

<llo_original>
// kernel: tpu_custom_call.1
$region0: #{tpu_custom_call.1}
  #allocation0 [shape = 'u32[]', space=smem, size = 0x4, offset = 0x4, fixed_abs, tag = 'smem constant byte address 0x4 - core index']
  #allocation1 [shape = 'u32[144,128]{1,0:T(1,128)}', space=vmem, size = 0x12000, scoped, tag = 'internal scratch']
  %s0 = inlined_call_operand.hbm [shape: f32[2,32], index: 0, kind: input, shape index: {}]
  %s1 = inlined_call_operand.vmem [shape: f32[2,32], index: 1, kind: input, shape index: {}]
  %s2 = inlined_call_operand.hbm [shape: f32[2,16,32], index: 2, kind: input, shape index: {}]
  %s3 = inlined_call_operand.hbm [shape: f32[2,8,32], index: 3, kind: input, shape index: {}]
  %s4 = inlined_call_operand.hbm [shape: f32[2,32], index: 4, kind: output, shape index: {0}]
  %s5 = inlined_call_operand.hbm [shape: f32[2,32], index: 5, kind: output, shape index: {1}]
  %6 = xla_tuple %s4, %s5
  %s7 = sld [smem:[#allocation0]]
  $region46: #{tpu_custom_call.1} parent=0
    _
  %s9 = ssub.s32 1, %s7
  %s10 = scalar_select 0, %s9, %s7
  $region1: #{tpu_custom_call.1} parent=0
    #allocation2 [shape = 'u8[1024]{0}', space=vmem, size = 0x400, scoped, tag = 'input window, operand 0, single buffered']
    #allocation3 [shape = 's32[1]{0}', space=sflag, size = 0x4, scoped, tag = 'scoped memory for tpu_custom_call.1']
    #allocation4 [shape = 's32[1]{0}', space=sflag, size = 0x4, scoped, tag = 'scoped memory for tpu_custom_call.1']
    #allocation5 [shape = 'u8[16384]{0}', space=vmem, size = 0x4000, scoped, tag = 'input window, operand 2, single buffered']
    #allocation6 [shape = 's32[1]{0}', space=sflag, size = 0x4, scoped, tag = 'scoped memory for tpu_custom_call.1']
    #allocation7 [shape = 'u8[8192]{0}', space=vmem, size = 0x2000, scoped, tag = 'input window, operand 3, single buffered']
    #allocation8 [shape = 'u8[1024]{0}', space=vmem, size = 0x400, scoped, tag = 'output window, operand 0, single buffered']
    #allocation9 [shape = 'u8[1024]{0}', space=vmem, size = 0x400, scoped, tag = 'output window, operand 1, single buffered']
    #allocation10 [shape = 's32[1]{0}', space=sflag, size = 0x4, scoped, tag = 'scoped memory for tpu_custom_call.1']
    %11 = vsyncpa [#allocation3], 0
    %12 = vsyncpa [#allocation6], 0
    %13 = vsyncpa [#allocation4], 0
    %14 = vsyncpa [#allocation10], 0
    // Predicated region
    $region2: #{tpu_custom_call.1} parent=1 // pred_check
      _
    $region3: #{tpu_custom_call.1} parent=1 // pred_check_branch
      %16 = sbr.rel (0) target = $region5
    $region4: #{tpu_custom_call.1} parent=1 // pred_region
      %s18 = ssub.s32 32, 32
      %19 = vsyncadd [#allocation3], %s18
      %s21 = sshll.u32 [#allocation2], 4
      %s22 = int_to_ptr.vmem [resolvable:$true] %s21
      %24 = dma.hbm_to_vmem [thread:$0]  %s0, 32, %s22, [#allocation3]
    $region5: #{tpu_custom_call.1} parent=1 // pred_fallthru
      _
    // Predicated region
    $region6: #{tpu_custom_call.1} parent=1 // pred_check
      _
    $region7: #{tpu_custom_call.1} parent=1 // pred_check_branch
      %26 = sbr.rel (0) target = $region9
    $region8: #{tpu_custom_call.1} parent=1 // pred_region
      _
    $region9: #{tpu_custom_call.1} parent=1 // pred_fallthru
      _
    // Predicated region
    $region10: #{tpu_custom_call.1} parent=1 // pred_check
      _
    $region11: #{tpu_custom_call.1} parent=1 // pred_check_branch
      %28 = sbr.rel (0) target = $region13
    $region12: #{tpu_custom_call.1} parent=1 // pred_region
      %s30 = ssub.s32 512, 512
      %31 = vsyncadd [#allocation6], %s30
      %s32 = sshll.u32 [#allocation5], 4
      %s33 = int_to_ptr.vmem [resolvable:$true] %s32
      %38 = dma.hbm_to_vmem [thread:$0]  %s2, 512, %s33, [#allocation6], 128, 128, 8
    $region13: #{tpu_custom_call.1} parent=1 // pred_fallthru
      _
    // Predicated region
    $region14: #{tpu_custom_call.1} parent=1 // pred_check
      _
    $region15: #{tpu_custom_call.1} parent=1 // pred_check_branch
      %40 = sbr.rel (0) target = $region17
    $region16: #{tpu_custom_call.1} parent=1 // pred_region
      %s42 = ssub.s32 256, 256
      %43 = vsyncadd [#allocation6], %s42
      %s44 = sshll.u32 [#allocation7], 4
      %s45 = int_to_ptr.vmem [resolvable:$true] %s44
      %50 = dma.hbm_to_vmem [thread:$0]  %s3, 256, %s45, [#allocation6], 128, 128, 8
    $region17: #{tpu_custom_call.1} parent=1 // pred_fallthru
      _
    // Predicated region
    $region18: #{tpu_custom_call.1} parent=1 // pred_check
      _
    $region19: #{tpu_custom_call.1} parent=1 // pred_check_branch
      %52 = sbr.rel (0) target = $region21
    $region20: #{tpu_custom_call.1} parent=1 // pred_region
      %53 = dma.done [#allocation3], 32
    $region21: #{tpu_custom_call.1} parent=1 // pred_fallthru
      _
    // Predicated region
    $region22: #{tpu_custom_call.1} parent=1 // pred_check
      _
    $region23: #{tpu_custom_call.1} parent=1 // pred_check_branch
      %55 = sbr.rel (0) target = $region25
    $region24: #{tpu_custom_call.1} parent=1 // pred_region
      %56 = dma.done [#allocation6], 512
    $region25: #{tpu_custom_call.1} parent=1 // pred_fallthru
      _
    // Predicated region
    $region26: #{tpu_custom_call.1} parent=1 // pred_check
      _
    $region27: #{tpu_custom_call.1} parent=1 // pred_check_branch
      %58 = sbr.rel (0) target = $region29
    $region28: #{tpu_custom_call.1} parent=1 // pred_region
      %59 = dma.done [#allocation6], 256
    $region29: #{tpu_custom_call.1} parent=1 // pred_fallthru
      _
    %v60 = vld [vmem:[#allocation2] sm:$0x3]
    %v61 = vld [vmem:[%s1] sm:$0x3]
    %v62 = vld [vmem:[#allocation5] sm:$0xff]
    %v63 = vld [vmem:[#allocation5 + $0x8] sm:$0xff]
    %v64 = vld [vmem:[#allocation5 + $0x10] sm:$0xff]
    %v65 = vld [vmem:[#allocation5 + $0x18] sm:$0xff]
    %v66 = vld [vmem:[#allocation7] sm:$0xff]
    %v67 = vld [vmem:[#allocation7 + $0x8] sm:$0xff]
    %v70 = vunpack.c.l.s4 1966171168
    %v71 = vunpack.c.0.s8 %v70
    %v72 = vlaneseq
    %v73 = vshrl.u32 %v72, 7
    %v74 = vsub.s32 %v71, %v73
    %v75 = vrot.slane %v61, %v74
    %v76 = vcombine.high %v75, %v75
    %v78 = vunpack.c.l.s4 1966171168
    %v79 = vunpack.c.0.s8 %v78
    %v80 = vlaneseq
    %v81 = vshrl.u32 %v80, 7
    %v82 = vsub.s32 %v79, %v81
    %v83 = vrot.slane %v75, %v82
    %v85 = vunpack.c.l.s4 1966171168
    %v86 = vunpack.c.0.s8 %v85
    %v87 = vlaneseq
    %v88 = vshrl.u32 %v87, 7
    %v89 = vsub.s32 %v86, %v88
    %v90 = vrot.slane %v76, %v89
    %v91 = vlaneseq
    %v92 = vshrl.u32 %v91, 7
    %v93 = vsub.s32 0, %v92
    %v94 = vrot.slane %v83, %v93
    %v95 = vlaneseq
    %v96 = vshrl.u32 %v95, 7
    %v97 = vsub.s32 0, %v96
    %v98 = vrot.slane %v90, %v97
    %v101 = vmul.f32 %v94, %v62
    %v102 = vmul.f32 %v94, %v63
    %v103 = vmul.f32 %v98, %v64
    %v104 = vmul.f32 %v98, %v65
    %vm105 = vcmask 261120
    %v106 = vsel %vm105, %v101, 0.0
    %107 = vadd.xlane.f32.xlu0 %v106
    %v108 = vpop.xlane.xlu0 %107
    %v109 = vsel %vm105, %v102, 0.0
    %110 = vadd.xlane.f32.xlu0 %v109
    %v111 = vpop.xlane.xlu0 %110
    %v112 = vsel %vm105, %v103, 0.0
    %113 = vadd.xlane.f32.xlu0 %v112
    %v114 = vpop.xlane.xlu0 %113
    %v115 = vsel %vm105, %v104, 0.0
    %116 = vadd.xlane.f32.xlu0 %v115
    %v117 = vpop.xlane.xlu0 %116
    %v120 = vunpack.c.l.s4 1966171168
    %v121 = vunpack.c.0.s8 %v120
    %v122 = vlaneseq
    %v123 = vshrl.u32 %v122, 7
    %v124 = vsub.s32 %v121, %v123
    %v125 = vrot.slane %v60, %v124
    %v126 = vcombine.high %v125, %v125
    %v128 = vunpack.c.l.s4 1966171168
    %v129 = vunpack.c.0.s8 %v128
    %v130 = vlaneseq
    %v131 = vshrl.u32 %v130, 7
    %v132 = vsub.s32 %v129, %v131
    %v133 = vrot.slane %v125, %v132
    %v135 = vunpack.c.l.s4 1966171168
    %v136 = vunpack.c.0.s8 %v135
    %v137 = vlaneseq
    %v138 = vshrl.u32 %v137, 7
    %v139 = vsub.s32 %v136, %v138
    %v140 = vrot.slane %v126, %v139
    %v141 = vlaneseq
    %v142 = vshrl.u32 %v141, 7
    %v143 = vsub.s32 0, %v142
    %v144 = vrot.slane %v133, %v143
    %v145 = vlaneseq
    %v146 = vshrl.u32 %v145, 7
    %v147 = vsub.s32 0, %v146
    %v148 = vrot.slane %v140, %v147
    %v151 = vmul.f32 %v144, %v66
    %v152 = vmul.f32 %v148, %v67
    %v153 = vsel %vm105, %v151, 0.0
    %154 = vadd.xlane.f32.xlu0 %v153
    %v155 = vpop.xlane.xlu0 %154
    %v156 = vsel %vm105, %v152, 0.0
    %157 = vadd.xlane.f32.xlu0 %v156
    %v158 = vpop.xlane.xlu0 %157
    %v163 = vlaneseq
    %v164 = vand.u32 %v163, 127
    %v165 = vlaneseq
    %v166 = vshrl.u32 %v165, 7
    %v167 = vsub.s32 %v164, %v166
    %v168 = vrot.slane %v108, %v167
    %v169 = vadd.s32 %v164, 4294967288
    %v170 = vlaneseq
    %v171 = vshrl.u32 %v170, 7
    %v172 = vsub.s32 %v169, %v171
    %v173 = vrot.slane %v111, %v172
    %vm174 = vcmask 130112
    %v175 = vsel %vm174, %v173, %v168
    %v176 = vlaneseq
    %v177 = vshrl.u32 %v176, 7
    %v178 = vsub.s32 %v164, %v177
    %v179 = vrot.slane %v114, %v178
    %v180 = vlaneseq
    %v181 = vshrl.u32 %v180, 7
    %v182 = vsub.s32 %v169, %v181
    %v183 = vrot.slane %v117, %v182
    %v184 = vsel %vm174, %v183, %v179
    %vm185 = vcmask 1041409
    %v186 = vsel %vm185, %v184, %v175
    %vm188 = vcmask 123904
    %v189 = vsel %vm188, %v186, -inf
    %190 = vmax.xlane.f32.xlu0 %v189
    %v191 = vpop.xlane.xlu0 %190
    %v193 = vlaneseq
    %v194 = vshrl.u32 %v193, 7
    %v195 = vsub.s32 0, %v194
    %v196 = vrot.slane %v191, %v195
    %v197 = vlaneseq
    %v198 = vshrl.u32 %v197, 7
    %v199 = vsub.s32 1, %v198
    %v200 = vrot.slane %v191, %v199
    %v203 = vsub.f32 %v108, %v196
    %v204 = vsub.f32 %v111, %v196
    %v205 = vsub.f32 %v114, %v200
    %v206 = vsub.f32 %v117, %v200
    %v207 = vmul.f32 %v203, 1.442695
    %v208 = vpow.pop %v207
    %v209 = vmul.f32 %v204, 1.442695
    %v210 = vpow.pop %v209
    %v211 = vmul.f32 %v205, 1.442695
    %v212 = vpow.pop %v211
    %v213 = vmul.f32 %v206, 1.442695
    %v214 = vpow.pop %v213
    %219 = vset.pattern.permute.xlu0 0
    %220 = vperm.xlu0 %219, %v208
    %v221 = vpop.permute.xlu0 %220
    %222 = vset.pattern.permute.xlu0 0
    %223 = vperm.xlu0 %222, %v210
    %v224 = vpop.permute.xlu0 %223
    %225 = vset.pattern.permute.xlu0 0
    %226 = vperm.xlu0 %225, %v212
    %v227 = vpop.permute.xlu0 %226
    %228 = vset.pattern.permute.xlu0 0
    %229 = vperm.xlu0 %228, %v214
    %v230 = vpop.permute.xlu0 %229
    %v231 = vlaneseq
    %v232 = vshrl.u32 %v231, 7
    %v233 = vsub.s32 %v164, %v232
    %v234 = vrot.slane %v221, %v233
    %v235 = vlaneseq
    %v236 = vshrl.u32 %v235, 7
    %v237 = vsub.s32 %v169, %v236
    %v238 = vrot.slane %v224, %v237
    %v239 = vsel %vm174, %v238, %v234
    %v240 = vlaneseq
    %v241 = vshrl.u32 %v240, 7
    %v242 = vsub.s32 %v164, %v241
    %v243 = vrot.slane %v227, %v242
    %v244 = vlaneseq
    %v245 = vshrl.u32 %v244, 7
    %v246 = vsub.s32 %v169, %v245
    %v247 = vrot.slane %v230, %v246
    %v248 = vsel %vm174, %v247, %v243
    %v249 = vsel %vm185, %v248, %v239
    %v251 = vsel %vm188, %v249, 0.0
    %252 = vadd.xlane.f32.xlu0 %v251
    %v253 = vpop.xlane.xlu0 %252
    %v255 = vlaneseq
    %v256 = vshrl.u32 %v255, 7
    %v257 = vsub.s32 0, %v256
    %v258 = vrot.slane %v253, %v257
    %v259 = vlaneseq
    %v260 = vshrl.u32 %v259, 7
    %v261 = vsub.s32 1, %v260
    %v262 = vrot.slane %v253, %v261
    %v265 = vrcp.pop %v258
    %v266 = vmul.f32 %v208, %v265
    %v267 = vmul.f32 %v210, %v265
    %v268 = vrcp.pop %v262
    %v269 = vmul.f32 %v212, %v268
    %v270 = vmul.f32 %v214, %v268
    %v273 = vlaneseq
    %v274 = vshrl.u32 %v273, 7
    %v275 = vsub.s32 %v164, %v274
    %v276 = vrot.slane %v155, %v275
    %v277 = vlaneseq
    %v278 = vshrl.u32 %v277, 7
    %v279 = vsub.s32 %v164, %v278
    %v280 = vrot.slane %v158, %v279
    %v281 = vsel %vm185, %v280, %v276
    %vm283 = vcmask 58368
    %v284 = vsel %vm283, %v281, -inf
    %285 = vmax.xlane.f32.xlu0 %v284
    %v286 = vpop.xlane.xlu0 %285
    %v288 = vlaneseq
    %v289 = vshrl.u32 %v288, 7
    %v290 = vsub.s32 0, %v289
    %v291 = vrot.slane %v286, %v290
    %v292 = vlaneseq
    %v293 = vshrl.u32 %v292, 7
    %v294 = vsub.s32 1, %v293
    %v295 = vrot.slane %v286, %v294
    %v298 = vsub.f32 %v155, %v291
    %v299 = vsub.f32 %v158, %v295
    %v300 = vmul.f32 %v298, 1.442695
    %v301 = vpow.pop %v300
    %v302 = vmul.f32 %v299, 1.442695
    %v303 = vpow.pop %v302
    %306 = vset.pattern.permute.xlu0 0
    %307 = vperm.xlu0 %306, %v301
    %v308 = vpop.permute.xlu0 %307
    %309 = vset.pattern.permute.xlu0 0
    %310 = vperm.xlu0 %309, %v303
    %v311 = vpop.permute.xlu0 %310
    %v312 = vlaneseq
    %v313 = vshrl.u32 %v312, 7
    %v314 = vsub.s32 %v164, %v313
    %v315 = vrot.slane %v308, %v314
    %v316 = vlaneseq
    %v317 = vshrl.u32 %v316, 7
    %v318 = vsub.s32 %v164, %v317
    %v319 = vrot.slane %v311, %v318
    %v320 = vsel %vm185, %v319, %v315
    %v322 = vsel %vm283, %v320, 0.0
    %323 = vadd.xlane.f32.xlu0 %v322
    %v324 = vpop.xlane.xlu0 %323
    %v326 = vlaneseq
    %v327 = vshrl.u32 %v326, 7
    %v328 = vsub.s32 0, %v327
    %v329 = vrot.slane %v324, %v328
    %v330 = vlaneseq
    %v331 = vshrl.u32 %v330, 7
    %v332 = vsub.s32 1, %v331
    %v333 = vrot.slane %v324, %v332
    %v336 = vrcp.pop %v329
    %v337 = vmul.f32 %v301, %v336
    %v338 = vrcp.pop %v333
    %v339 = vmul.f32 %v303, %v338
    %341 = vset.pattern.permute.xlu0 0
    %342 = vperm.xlu0 %341, %v337
    %v343 = vpop.permute.xlu0 %342
    %346 = vset.pattern.permute.xlu0 0
    %347 = vperm.xlu0 %346, %v339
    %v348 = vpop.permute.xlu0 %347
    %v350 = vmul.f32 %v343, %v66
    %v351 = vmul.f32 %v348, %v67
    %v352 = vsel %vm105, %v350, 0.0
    %v353 = vrot.slane %v352, 4
    %v354 = vadd.f32 %v352, %v353
    %v355 = vrot.slane %v354, 2
    %v356 = vadd.f32 %v354, %v355
    %v357 = vrot.slane %v356, 1
    %v358 = vadd.f32 %v356, %v357
    %v359 = vsel %vm105, %v351, 0.0
    %v360 = vrot.slane %v359, 4
    %v361 = vadd.f32 %v359, %v360
    %v362 = vrot.slane %v361, 2
    %v363 = vadd.f32 %v361, %v362
    %v364 = vrot.slane %v363, 1
    %v365 = vadd.f32 %v363, %v364
    %367 = vset.pattern.permute.xlu0 0
    %368 = vperm.xlu0 %367, %v266
    %v369 = vpop.permute.xlu0 %368
    %372 = vset.pattern.permute.xlu0 0
    %373 = vperm.xlu0 %372, %v267
    %v374 = vpop.permute.xlu0 %373
    %377 = vset.pattern.permute.xlu0 0
    %378 = vperm.xlu0 %377, %v269
    %v379 = vpop.permute.xlu0 %378
    %382 = vset.pattern.permute.xlu0 0
    %383 = vperm.xlu0 %382, %v270
    %v384 = vpop.permute.xlu0 %383
    %v386 = vmul.f32 %v369, %v62
    %v387 = vmul.f32 %v374, %v63
    %v388 = vmul.f32 %v379, %v64
    %v389 = vmul.f32 %v384, %v65
    %v390 = vsel %vm105, %v386, 0.0
    %v391 = vsel %vm105, %v387, 0.0
    %v392 = vadd.f32 %v390, %v391
    %v393 = vrot.slane %v392, 4
    %v394 = vadd.f32 %v392, %v393
    %v395 = vrot.slane %v394, 2
    %v396 = vadd.f32 %v394, %v395
    %v397 = vrot.slane %v396, 1
    %v398 = vadd.f32 %v396, %v397
    %v399 = vsel %vm105, %v388, 0.0
    %v400 = vsel %vm105, %v389, 0.0
    %v401 = vadd.f32 %v399, %v400
    %v402 = vrot.slane %v401, 4
    %v403 = vadd.f32 %v401, %v402
    %v404 = vrot.slane %v403, 2
    %v405 = vadd.f32 %v403, %v404
    %v406 = vrot.slane %v405, 1
    %v407 = vadd.f32 %v405, %v406
    %v410 = vsel %vm185, %v365, %v358
    %v412 = vadd.f32 %v60, %v410
    %vm413 = vcmask 254976
    %414 = vst.msk [vmem:[#allocation8] sm:$0x3] %vm413, %v412
    %v417 = vsel %vm185, %v407, %v398
    %v419 = vadd.f32 %v61, %v417
    %420 = vst.msk [vmem:[#allocation9] sm:$0x3] %vm413, %v419
    // Predicated region
    $region30: #{tpu_custom_call.1} parent=1 // pred_check
      _
    $region31: #{tpu_custom_call.1} parent=1 // pred_check_branch
      %422 = sbr.rel (0) target = $region33
    $region32: #{tpu_custom_call.1} parent=1 // pred_region
      %s424 = ssub.s32 32, 32
      %425 = vsyncadd [#allocation4], %s424
      %s427 = sshll.u32 [#allocation8], 4
      %s428 = int_to_ptr.vmem [resolvable:$true] %s427
      %430 = dma.vmem_to_hbm [thread:$0]  %s428, 32, %s4, [#allocation4]
    $region33: #{tpu_custom_call.1} parent=1 // pred_fallthru
      _
    // Predicated region
    $region34: #{tpu_custom_call.1} parent=1 // pred_check
      _
    $region35: #{tpu_custom_call.1} parent=1 // pred_check_branch
      %432 = sbr.rel (0) target = $region37
    $region36: #{tpu_custom_call.1} parent=1 // pred_region
      %s434 = ssub.s32 32, 32
      %435 = vsyncadd [#allocation10], %s434
      %s437 = sshll.u32 [#allocation9], 4
      %s438 = int_to_ptr.vmem [resolvable:$true] %s437
      %440 = dma.vmem_to_hbm [thread:$0]  %s438, 32, %s5, [#allocation10]
    $region37: #{tpu_custom_call.1} parent=1 // pred_fallthru
      _
    // Predicated region
    $region38: #{tpu_custom_call.1} parent=1 // pred_check
      _
    $region39: #{tpu_custom_call.1} parent=1 // pred_check_branch
      %442 = sbr.rel (0) target = $region41
    $region40: #{tpu_custom_call.1} parent=1 // pred_region
      %443 = dma.done [#allocation4], 32
    $region41: #{tpu_custom_call.1} parent=1 // pred_fallthru
      _
    // Predicated region
    $region42: #{tpu_custom_call.1} parent=1 // pred_check
      _
    $region43: #{tpu_custom_call.1} parent=1 // pred_check_branch
      %445 = sbr.rel (0) target = $region45
    $region44: #{tpu_custom_call.1} parent=1 // pred_region
      %446 = dma.done [#allocation10], 32
    $region45: #{tpu_custom_call.1} parent=1 // pred_fallthru
      _
    %447 = vsyncpa [#allocation3], 1
    %448 = vsyncpa [#allocation6], 1
    %449 = vsyncpa [#allocation4], 1
    %450 = vsyncpa [#allocation10], 1

</llo_original>
